<compile_context>
chip_gen: v7x
topology: tpu7x:2x2x1
jax: 0.10.0
libtpu: 0.0.40
codegen_flags: <defaults>
</compile_context>

<pallas_src>
from typing import NamedTuple

import jax
import jax.numpy as jnp
from jax.experimental import pallas as pl
from jax.experimental.pallas import tpu as pltpu


_MAX_TILE_ROWS = 2048   # packed rows per grid step (block ~= 1 MiB for f32)
_MIN_GRID_STEPS = 2     # prefer an even >=2-step grid so both v7x TCs are used


def _round_up(a, b):
    return (a + b - 1) // b * b


def _cdiv(a, b):
    return -(-a // b)


class HourglassParams(NamedTuple):
    """Lane-packed parameters (built once at init by pack_hourglass_params)."""
    w1: jax.Array   # (P*D, P*H)  block-diagonal kron(I_P, W1)   (or (D,H) when P==1)
    b1: jax.Array   # (1, P*H)
    w2: jax.Array   # (P*H, P*D)  block-diagonal kron(I_P, W2)
    b2: jax.Array   # (1, P*D)


def pack_hourglass_params(w1, b1, w2, b2):
    """Pre-expand weights for lane-dense execution.  Call ONCE at layer init.

    w1: (D, H), b1: (H,), w2: (H, D), b2: (D,)   (stored (in, out), i.e. the
    transpose of PyTorch nn.Linear.weight).

    When 128 % D == 0 and the expanded hidden width P*H still fits in 128
    lanes, P = 128 // D consecutive logical rows are packed into one 128-lane
    row and the weights are expanded to block-diagonal form, so the kernel
    remains a plain  x @ W1 + b1 -> SiLU -> @ W2 + b2  with all 128 lanes used
    on every load/store.  For larger D/H the packing is skipped (P = 1): kron
    inflates MXU work by P and weight bytes by P^2, which only pays off while
    the kernel is HBM-bound on a narrow D.

    Note: the kron zero blocks compute 0*x; a non-finite value in one logical
    row can contaminate its P-1 lane-neighbours (0*Inf = NaN).  Fine for
    finite activations; use P=1 semantics if non-finite inputs are expected.
    """
    D, H = w1.shape
    P = 1
    if D <= 128 and 128 % D == 0:
        cand = 128 // D
        if cand > 1 and cand * H <= 128:
            P = cand
    if P == 1:
        return HourglassParams(w1, b1.reshape(1, H), w2, b2.reshape(1, D))
    eye = jnp.eye(P, dtype=w1.dtype)
    w1p = jnp.kron(eye, w1)                       # (P*D, P*H)
    w2p = jnp.kron(eye.astype(w2.dtype), w2)      # (P*H, P*D)
    b1p = jnp.tile(b1, P).reshape(1, P * H)
    b2p = jnp.tile(b2, P).reshape(1, P * D)
    return HourglassParams(w1p, b1p, w2p, b2p)


def _hourglass_kernel(x_ref, w1_ref, b1_ref, w2_ref, b2_ref, o_ref):
    # x_ref : (tm, P*D)   w1_ref: (P*D, P*H)   b1_ref: (1, P*H)
    # w2_ref: (P*H, P*D)  b2_ref: (1, P*D)     o_ref : (tm, P*D)
    # No input upcast: bf16 activations/weights feed the MXU natively; f32
    # accumulation via preferred_element_type.  astype's below are identities
    # for f32 inputs.
    h = jnp.dot(x_ref[...], w1_ref[...], preferred_element_type=jnp.float32)
    h = h + b1_ref[...].astype(jnp.float32)
    h = h * jax.nn.sigmoid(h)                     # SiLU in f32; sigmoid -> EUP slot
    y = jnp.dot(h.astype(w2_ref.dtype), w2_ref[...],
                preferred_element_type=jnp.float32)
    y = y + b2_ref[...].astype(jnp.float32)
    o_ref[...] = y.astype(o_ref.dtype)


def _choose_tiles(Mp, sublane, max_tile_rows):
    """Pick (tile_rows, grid_steps) in packed-row space.

    Big tiles amortise the ~0.35us per-step cost; when there is enough data we
    use an even number of >=2 steps so the "parallel" grid axis shards across
    both TensorCores on v7x.  Tiny inputs get a single full-extent block
    (always a legal block shape regardless of the (8,128) rule)."""
    max_tile_rows = max(sublane, (max_tile_rows // sublane) * sublane)
    if Mp < _MIN_GRID_STEPS * sublane:
        return Mp, 1
    n = max(_MIN_GRID_STEPS, _cdiv(Mp, max_tile_rows))
    if n % 2:
        n += 1                                    # even step count for 2-TC chips
    tm = min(max_tile_rows, _round_up(_cdiv(Mp, n), sublane))
    return tm, _cdiv(Mp, tm)


def hourglass_dense_layer(x, params: HourglassParams, *,
                          max_tile_rows=_MAX_TILE_ROWS,
                          single_buffer_weights=True):
    """Fused Linear(D->H) -> SiLU -> Linear(H->D) on (..., D) activations."""
    orig_shape = x.shape
    D = orig_shape[-1]
    Dp, Hp = params.w1.shape
    assert Dp % D == 0 and params.w2.shape == (Hp, Dp)
    P = Dp // D

    x2d = x.reshape(-1, D)
    M = x2d.shape[0]

    itemsize = jnp.dtype(x.dtype).itemsize
    sublane = max(8, 32 // itemsize)              # f32 -> 8, bf16 -> 16, int8/fp8 -> 32

    # Pack P logical rows per 128-lane row.  Pad (one extra HBM pass) only when
    # M is not already a multiple of P; raggedness along the row-tile axis is
    # handled by Pallas partial blocks, so no tile-multiple padding and no
    # output slice-copy in the common case.
    pad_rows = (-M) % P
    if pad_rows:
        x2d = jnp.pad(x2d, ((0, pad_rows), (0, 0)))
    Mp = (M + pad_rows) // P
    xp = x2d.reshape(Mp, Dp)                      # row-major: free re-view of the slab

    tm, n_steps = _choose_tiles(Mp, sublane, max_tile_rows)

    w_itemsize = jnp.dtype(params.w1.dtype).itemsize
    cost = pl.CostEstimate(
        flops=4 * Mp * Dp * Hp,                   # what the kernel actually executes
        transcendentals=Mp * Hp,                  # sigmoid
        bytes_accessed=(2 * Mp * Dp) * itemsize
        + (2 * Dp * Hp + Hp + Dp) * w_itemsize,   # weights fetched once (resident)
    )

    def launch(single_buffer):
        # Constant index_map -> weights stay resident in VMEM; single-buffering
        # them removes the redundant second copy (headroom on v7x's 64 MiB VMEM).
        wkw = dict(pipeline_mode=pl.Buffered(1)) if single_buffer else {}
        grid_spec = pltpu.PrefetchScalarGridSpec(
            num_scalar_prefetch=0,
            grid=(n_steps,),
            in_specs=[
                pl.BlockSpec((tm, Dp), lambda i: (i, 0)),          # activation tile
                pl.BlockSpec((Dp, Hp), lambda i: (0, 0), **wkw),   # W1
                pl.BlockSpec((1, Hp), lambda i: (0, 0), **wkw),    # b1
                pl.BlockSpec((Hp, Dp), lambda i: (0, 0), **wkw),   # W2
                pl.BlockSpec((1, Dp), lambda i: (0, 0), **wkw),    # b2
            ],
            out_specs=pl.BlockSpec((tm, Dp), lambda i: (i, 0)),
        )
        # Scoped-VMEM estimate: in/out double-buffered + weights (x1 or x2).
        wbuf = 1 if single_buffer else 2
        vmem_est = (4 * tm * Dp * itemsize
                    + wbuf * (2 * Dp * Hp + Hp + Dp) * w_itemsize)
        ckw = {}
        if vmem_est > 12 * 1024 * 1024:           # v5e default scoped VMEM is 16 MiB
            ckw = dict(vmem_limit_bytes=int(vmem_est * 3 // 2))
        return pl.pallas_call(
            _hourglass_kernel,
            out_shape=jax.ShapeDtypeStruct((Mp, Dp), x.dtype),
            grid_spec=grid_spec,
            compiler_params=pltpu.CompilerParams(
                dimension_semantics=("parallel",), **ckw),
            cost_estimate=cost,
        )(xp, params.w1, params.b1, params.w2, params.b2)

    if single_buffer_weights:
        try:
            out = launch(True)
        except Exception:
            # pipeline_mode=pl.Buffered(1) support varies across jax versions;
            # fall back to default double-buffered weight specs.
            out = launch(False)
    else:
        out = launch(False)

    y = out.reshape(Mp * P, D)
    if pad_rows:
        y = y[:M]
    return y.reshape(orig_shape)


def _reference(x, w1, b1, w2, b2):
    h = x @ w1 + b1
    h = h * jax.nn.sigmoid(h)
    return h @ w2 + b2


if __name__ == "__main__":
    # Module config: input_dim=32, downscale_ratio=4 -> hidden = 8
    input_dim = 32
    downscale_ratio = 4
    hidden_dim = input_dim // downscale_ratio

    batch, seq = 2, 8

    key = jax.random.PRNGKey(0)
    kx, kw1, kb1, kw2, kb2 = jax.random.split(key, 5)

    x = jax.random.normal(kx, (batch, seq, input_dim), dtype=jnp.float32)

    # Deterministic parameter init (PyTorch Linear-style uniform bounds);
    # weights stored (in, out) = transpose of nn.Linear.weight.
    bound1 = 1.0 / (input_dim ** 0.5)
    w1 = jax.random.uniform(kw1, (input_dim, hidden_dim), jnp.float32,
                            -bound1, bound1)
    b1 = jax.random.uniform(kb1, (hidden_dim,), jnp.float32, -bound1, bound1)
    bound2 = 1.0 / (hidden_dim ** 0.5)
    w2 = jax.random.uniform(kw2, (hidden_dim, input_dim), jnp.float32,
                            -bound2, bound2)
    b2 = jax.random.uniform(kb2, (input_dim,), jnp.float32, -bound2, bound2)

    # Pack weights ONCE (layer init), not per forward call.
    params = pack_hourglass_params(w1, b1, w2, b2)

    y = hourglass_dense_layer(x, params)
    y = jax.block_until_ready(y)

    y_ref = _reference(x, w1, b1, w2, b2)
    assert y.shape == x.shape
    assert jnp.allclose(y, y_ref, atol=1e-5, rtol=1e-5), "mismatch vs reference"

    print("KERNEL_OK")
</pallas_src>

<mosaic_0001>
module attributes {stable_mosaic.version = 11 : i64} {
  func.func @_hourglass_kernel(%arg0: i32, %arg1: memref<4x128xf32, #tpu.memory_space<vmem>>, %arg2: memref<128x32xf32, #tpu.memory_space<vmem>>, %arg3: memref<1x32xf32, #tpu.memory_space<vmem>>, %arg4: memref<32x128xf32, #tpu.memory_space<vmem>>, %arg5: memref<1x128xf32, #tpu.memory_space<vmem>>, %arg6: memref<4x128xf32, #tpu.memory_space<vmem>>) attributes {dimension_semantics = [#tpu.dimension_semantics<parallel>], iteration_bounds = array<i64: 1>, scalar_prefetch = 0 : i64, scratch_operands = 0 : i64, tpu.core_type = #tpu.core_type<tc>, window_params = [{transform_indices = @transform_0, window_bounds = array<i64: 4, 128>}, {pipeline_mode = #tpu.pipeline_mode<synchronous>, transform_indices = @transform_1, window_bounds = array<i64: 128, 32>}, {pipeline_mode = #tpu.pipeline_mode<synchronous>, transform_indices = @transform_2, window_bounds = array<i64: 1, 32>}, {pipeline_mode = #tpu.pipeline_mode<synchronous>, transform_indices = @transform_3, window_bounds = array<i64: 32, 128>}, {pipeline_mode = #tpu.pipeline_mode<synchronous>, transform_indices = @transform_4, window_bounds = array<i64: 1, 128>}, {transform_indices = @transform_5, window_bounds = array<i64: 4, 128>}]} {
    %c0 = arith.constant 0 : index
    %c0_0 = arith.constant 0 : index
    %0 = vector.load %arg1[%c0, %c0_0] : memref<4x128xf32, #tpu.memory_space<vmem>>, vector<4x128xf32>
    %c0_1 = arith.constant 0 : index
    %c0_2 = arith.constant 0 : index
    %1 = vector.load %arg2[%c0_1, %c0_2] : memref<128x32xf32, #tpu.memory_space<vmem>>, vector<128x32xf32>
    %cst = arith.constant dense<0.000000e+00> : vector<4x32xf32>
    %2 = tpu.matmul %0, %1, %cst {dimension_numbers = #tpu.dot_dimension_numbers<[1], [0], [0], [1], [0, 0, 1, 1], [], []>} : vector<4x128xf32>, vector<128x32xf32>, vector<4x32xf32> -> vector<4x32xf32>
    %c0_3 = arith.constant 0 : index
    %c0_4 = arith.constant 0 : index
    %3 = vector.load %arg3[%c0_3, %c0_4] : memref<1x32xf32, #tpu.memory_space<vmem>>, vector<1x32xf32>
    %4 = vector.broadcast %3 : vector<1x32xf32> to vector<4x32xf32>
    %5 = arith.addf %2, %4 : vector<4x32xf32>
    %6 = arith.negf %5 : vector<4x32xf32>
    %7 = math.exp %6 : vector<4x32xf32>
    %cst_5 = arith.constant 1.000000e+00 : f32
    %8 = vector.broadcast %cst_5 : f32 to vector<4x32xf32>
    %9 = arith.addf %8, %7 : vector<4x32xf32>
    %10 = arith.divf %8, %9 : vector<4x32xf32>
    %11 = arith.mulf %5, %10 : vector<4x32xf32>
    %c0_6 = arith.constant 0 : index
    %c0_7 = arith.constant 0 : index
    %12 = vector.load %arg4[%c0_6, %c0_7] : memref<32x128xf32, #tpu.memory_space<vmem>>, vector<32x128xf32>
    %cst_8 = arith.constant dense<0.000000e+00> : vector<4x128xf32>
    %13 = tpu.matmul %11, %12, %cst_8 {dimension_numbers = #tpu.dot_dimension_numbers<[1], [0], [0], [1], [0, 0, 1, 1], [], []>} : vector<4x32xf32>, vector<32x128xf32>, vector<4x128xf32> -> vector<4x128xf32>
    %c0_9 = arith.constant 0 : index
    %c0_10 = arith.constant 0 : index
    %14 = vector.load %arg5[%c0_9, %c0_10] : memref<1x128xf32, #tpu.memory_space<vmem>>, vector<1x128xf32>
    %15 = vector.broadcast %14 : vector<1x128xf32> to vector<4x128xf32>
    %16 = arith.addf %13, %15 : vector<4x128xf32>
    %c0_11 = arith.constant 0 : index
    %c0_12 = arith.constant 0 : index
    %17 = vector.load %arg6[%c0_11, %c0_12] : memref<4x128xf32, #tpu.memory_space<vmem>>, vector<4x128xf32>
    tpu.vector_store %arg6[%c0_11, %c0_12], %16 {strides = array<i32>} : memref<4x128xf32, #tpu.memory_space<vmem>>, vector<4x128xf32>,
    return
  }
  func.func @transform_0(%arg0: i32) -> (i32, i32) {
    %c0_i32 = arith.constant 0 : i32
    %c0_i32_0 = arith.constant 0 : i32
    return %arg0, %c0_i32 : i32, i32
  }
  func.func @transform_1(%arg0: i32) -> (i32, i32) {
    %c0_i32 = arith.constant 0 : i32
    %c0_i32_0 = arith.constant 0 : i32
    %c0_i32_1 = arith.constant 0 : i32
    return %c0_i32, %c0_i32_0 : i32, i32
  }
  func.func @transform_2(%arg0: i32) -> (i32, i32) {
    %c0_i32 = arith.constant 0 : i32
    %c0_i32_0 = arith.constant 0 : i32
    %c0_i32_1 = arith.constant 0 : i32
    return %c0_i32, %c0_i32_0 : i32, i32
  }
  func.func @transform_3(%arg0: i32) -> (i32, i32) {
    %c0_i32 = arith.constant 0 : i32
    %c0_i32_0 = arith.constant 0 : i32
    %c0_i32_1 = arith.constant 0 : i32
    return %c0_i32, %c0_i32_0 : i32, i32
  }
  func.func @transform_4(%arg0: i32) -> (i32, i32) {
    %c0_i32 = arith.constant 0 : i32
    %c0_i32_0 = arith.constant 0 : i32
    %c0_i32_1 = arith.constant 0 : i32
    return %c0_i32, %c0_i32_0 : i32, i32
  }
  func.func @transform_5(%arg0: i32) -> (i32, i32) {
    %c0_i32 = arith.constant 0 : i32
    %c0_i32_0 = arith.constant 0 : i32
    return %arg0, %c0_i32 : i32, i32
  }
}

module attributes {stable_mosaic.version = 11 : i64} {
  func.func @_hourglass_kernel(%arg0: i32, %arg1: memref<4x128xf32, #tpu.memory_space<vmem>>, %arg2: memref<128x32xf32, #tpu.memory_space<vmem>>, %arg3: memref<1x32xf32, #tpu.memory_space<vmem>>, %arg4: memref<32x128xf32, #tpu.memory_space<vmem>>, %arg5: memref<1x128xf32, #tpu.memory_space<vmem>>, %arg6: memref<4x128xf32, #tpu.memory_space<vmem>>) attributes {dimension_semantics = [#tpu.dimension_semantics<parallel>], iteration_bounds = array<i64: 1>, scalar_prefetch = 0 : i64, scratch_operands = 0 : i64, tpu.core_type = #tpu.core_type<tc>, window_params = [{transform_indices = @transform_0, window_bounds = array<i64: 4, 128>}, {pipeline_mode = #tpu.pipeline_mode<synchronous>, transform_indices = @transform_1, window_bounds = array<i64: 128, 32>}, {pipeline_mode = #tpu.pipeline_mode<synchronous>, transform_indices = @transform_2, window_bounds = array<i64: 1, 32>}, {pipeline_mode = #tpu.pipeline_mode<synchronous>, transform_indices = @transform_3, window_bounds = array<i64: 32, 128>}, {pipeline_mode = #tpu.pipeline_mode<synchronous>, transform_indices = @transform_4, window_bounds = array<i64: 1, 128>}, {transform_indices = @transform_5, window_bounds = array<i64: 4, 128>}]} {
    %c0 = arith.constant 0 : index
    %c0_0 = arith.constant 0 : index
    %0 = vector.load %arg1[%c0, %c0_0] : memref<4x128xf32, #tpu.memory_space<vmem>>, vector<4x128xf32>
    %c0_1 = arith.constant 0 : index
    %c0_2 = arith.constant 0 : index
    %1 = vector.load %arg2[%c0_1, %c0_2] : memref<128x32xf32, #tpu.memory_space<vmem>>, vector<128x32xf32>
    %cst = arith.constant dense<0.000000e+00> : vector<4x32xf32>
    %2 = tpu.matmul %0, %1, %cst {dimension_numbers = #tpu.dot_dimension_numbers<[1], [0], [0], [1], [0, 0, 1, 1], [], []>} : vector<4x128xf32>, vector<128x32xf32>, vector<4x32xf32> -> vector<4x32xf32>
    %c0_3 = arith.constant 0 : index
    %c0_4 = arith.constant 0 : index
    %3 = vector.load %arg3[%c0_3, %c0_4] : memref<1x32xf32, #tpu.memory_space<vmem>>, vector<1x32xf32>
    %4 = vector.broadcast %3 : vector<1x32xf32> to vector<4x32xf32>
    %5 = arith.addf %2, %4 : vector<4x32xf32>
    %6 = arith.negf %5 : vector<4x32xf32>
    %7 = math.exp %6 : vector<4x32xf32>
    %cst_5 = arith.constant 1.000000e+00 : f32
    %8 = vector.broadcast %cst_5 : f32 to vector<4x32xf32>
    %9 = arith.addf %8, %7 : vector<4x32xf32>
    %10 = arith.divf %8, %9 : vector<4x32xf32>
    %11 = arith.mulf %5, %10 : vector<4x32xf32>
    %c0_6 = arith.constant 0 : index
    %c0_7 = arith.constant 0 : index
    %12 = vector.load %arg4[%c0_6, %c0_7] : memref<32x128xf32, #tpu.memory_space<vmem>>, vector<32x128xf32>
    %cst_8 = arith.constant dense<0.000000e+00> : vector<4x128xf32>
    %13 = tpu.matmul %11, %12, %cst_8 {dimension_numbers = #tpu.dot_dimension_numbers<[1], [0], [0], [1], [0, 0, 1, 1], [], []>} : vector<4x32xf32>, vector<32x128xf32>, vector<4x128xf32> -> vector<4x128xf32>
    %c0_9 = arith.constant 0 : index
    %c0_10 = arith.constant 0 : index
    %14 = vector.load %arg5[%c0_9, %c0_10] : memref<1x128xf32, #tpu.memory_space<vmem>>, vector<1x128xf32>
    %15 = vector.broadcast %14 : vector<1x128xf32> to vector<4x128xf32>
    %16 = arith.addf %13, %15 : vector<4x128xf32>
    %c0_11 = arith.constant 0 : index
    %c0_12 = arith.constant 0 : index
    %17 = vector.load %arg6[%c0_11, %c0_12] : memref<4x128xf32, #tpu.memory_space<vmem>>, vector<4x128xf32>
    tpu.vector_store %arg6[%c0_11, %c0_12], %16 {strides = array<i32>} : memref<4x128xf32, #tpu.memory_space<vmem>>, vector<4x128xf32>,
    return
  }
  func.func @transform_0(%arg0: i32) -> (i32, i32) {
    %c0_i32 = arith.constant 0 : i32
    %c0_i32_0 = arith.constant 0 : i32
    return %arg0, %c0_i32 : i32, i32
  }
  func.func @transform_1(%arg0: i32) -> (i32, i32) {
    %c0_i32 = arith.constant 0 : i32
    %c0_i32_0 = arith.constant 0 : i32
    %c0_i32_1 = arith.constant 0 : i32
    return %c0_i32, %c0_i32_0 : i32, i32
  }
  func.func @transform_2(%arg0: i32) -> (i32, i32) {
    %c0_i32 = arith.constant 0 : i32
    %c0_i32_0 = arith.constant 0 : i32
    %c0_i32_1 = arith.constant 0 : i32
    return %c0_i32, %c0_i32_0 : i32, i32
  }
  func.func @transform_3(%arg0: i32) -> (i32, i32) {
    %c0_i32 = arith.constant 0 : i32
    %c0_i32_0 = arith.constant 0 : i32
    %c0_i32_1 = arith.constant 0 : i32
    return %c0_i32, %c0_i32_0 : i32, i32
  }
  func.func @transform_4(%arg0: i32) -> (i32, i32) {
    %c0_i32 = arith.constant 0 : i32
    %c0_i32_0 = arith.constant 0 : i32
    %c0_i32_1 = arith.constant 0 : i32
    return %c0_i32, %c0_i32_0 : i32, i32
  }
  func.func @transform_5(%arg0: i32) -> (i32, i32) {
    %c0_i32 = arith.constant 0 : i32
    %c0_i32_0 = arith.constant 0 : i32
    return %arg0, %c0_i32 : i32, i32
  }
}

</mosaic_0001>

<llo_original>
// kernel: tpu_custom_call.1
$region0: #{tpu_custom_call.1}
  #allocation0 [shape = 'u32[]', space=smem, size = 0x4, offset = 0x4, fixed_abs, tag = 'smem constant byte address 0x4 - core index']
  #allocation1 [shape = 'u32[144,128]{1,0:T(1,128)}', space=vmem, size = 0x12000, scoped, tag = 'internal scratch']
  %s0 = inlined_call_operand.vmem [shape: f32[4,128], index: 0, kind: input, shape index: {}]
  %s1 = inlined_call_operand.vmem [shape: f32[128,32], index: 1, kind: input, shape index: {}]
  %s2 = inlined_call_operand.vmem [shape: f32[1,32], index: 2, kind: input, shape index: {}]
  %s3 = inlined_call_operand.vmem [shape: f32[32,128], index: 3, kind: input, shape index: {}]
  %s4 = inlined_call_operand.vmem [shape: f32[1,128], index: 4, kind: input, shape index: {}]
  %s5 = inlined_call_operand.hbm [shape: f32[4,128], index: 5, kind: output, shape index: {}]
  %s6 = sld [smem:[#allocation0]]
  $region30: #{tpu_custom_call.1} parent=0
    _
  %s8 = ssub.s32 1, %s6
  %s9 = scalar_select 0, %s8, %s6
  $region1: #{tpu_custom_call.1} parent=0
    #allocation2 [shape = 'u8[2048]{0}', space=vmem, size = 0x800, scoped, tag = 'output window, operand 0, single buffered']
    #allocation3 [shape = 's32[1]{0}', space=sflag, size = 0x4, scoped, tag = 'scoped memory for tpu_custom_call.1']
    %10 = vsyncpa [#allocation3], 0
    // Predicated region
    $region2: #{tpu_custom_call.1} parent=1 // pred_check
      _
    $region3: #{tpu_custom_call.1} parent=1 // pred_check_branch
      %12 = sbr.rel (0) target = $region5
    $region4: #{tpu_custom_call.1} parent=1 // pred_region
      _
    $region5: #{tpu_custom_call.1} parent=1 // pred_fallthru
      _
    // Predicated region
    $region6: #{tpu_custom_call.1} parent=1 // pred_check
      _
    $region7: #{tpu_custom_call.1} parent=1 // pred_check_branch
      %14 = sbr.rel (0) target = $region9
    $region8: #{tpu_custom_call.1} parent=1 // pred_region
      _
    $region9: #{tpu_custom_call.1} parent=1 // pred_fallthru
      _
    // Predicated region
    $region10: #{tpu_custom_call.1} parent=1 // pred_check
      _
    $region11: #{tpu_custom_call.1} parent=1 // pred_check_branch
      %16 = sbr.rel (0) target = $region13
    $region12: #{tpu_custom_call.1} parent=1 // pred_region
      _
    $region13: #{tpu_custom_call.1} parent=1 // pred_fallthru
      _
    // Predicated region
    $region14: #{tpu_custom_call.1} parent=1 // pred_check
      _
    $region15: #{tpu_custom_call.1} parent=1 // pred_check_branch
      %18 = sbr.rel (0) target = $region17
    $region16: #{tpu_custom_call.1} parent=1 // pred_region
      _
    $region17: #{tpu_custom_call.1} parent=1 // pred_fallthru
      _
    // Predicated region
    $region18: #{tpu_custom_call.1} parent=1 // pred_check
      _
    $region19: #{tpu_custom_call.1} parent=1 // pred_check_branch
      %20 = sbr.rel (0) target = $region21
    $region20: #{tpu_custom_call.1} parent=1 // pred_region
      _
    $region21: #{tpu_custom_call.1} parent=1 // pred_fallthru
      _
    %v21 = vld [vmem:[%s0] sm:$0xf]
    %v22 = vld [vmem:[%s1] sm:$0xff]
    %v23 = vld [vmem:[%s1 + $0x8] sm:$0xff]
    %v24 = vld [vmem:[%s1 + $0x10] sm:$0xff]
    %v25 = vld [vmem:[%s1 + $0x18] sm:$0xff]
    %v26 = vld [vmem:[%s1 + $0x20] sm:$0xff]
    %v27 = vld [vmem:[%s1 + $0x28] sm:$0xff]
    %v28 = vld [vmem:[%s1 + $0x30] sm:$0xff]
    %v29 = vld [vmem:[%s1 + $0x38] sm:$0xff]
    %v30 = vld [vmem:[%s1 + $0x40] sm:$0xff]
    %v31 = vld [vmem:[%s1 + $0x48] sm:$0xff]
    %v32 = vld [vmem:[%s1 + $0x50] sm:$0xff]
    %v33 = vld [vmem:[%s1 + $0x58] sm:$0xff]
    %v34 = vld [vmem:[%s1 + $0x60] sm:$0xff]
    %v35 = vld [vmem:[%s1 + $0x68] sm:$0xff]
    %v36 = vld [vmem:[%s1 + $0x70] sm:$0xff]
    %v37 = vld [vmem:[%s1 + $0x78] sm:$0xff]
    %v38 = vld [vmem:[%s2] sm:$0x1]
    %v40 = vlaneseq
    %v41 = vshrl.u32 %v40, 7
    %v42 = vsub.s32 0, %v41
    %v43 = vrot.slane %v38, %v42
    %45 = vmatprep.subr.mxu0 0.0
    %46 = vmatpush1.msra.mxu0 %v22
    %47 = vmatprep.subr.mxu0 0.0
    %48 = vmatpush1.msra.mxu0 %v23
    %49 = vmatprep.subr.mxu0 0.0
    %50 = vmatpush1.msra.mxu0 %v24
    %51 = vmatprep.subr.mxu0 0.0
    %52 = vmatpush1.msra.mxu0 %v25
    %53 = vmatprep.subr.mxu0 0.0
    %54 = vmatpush1.msra.mxu0 %v26
    %55 = vmatprep.subr.mxu0 0.0
    %56 = vmatpush1.msra.mxu0 %v27
    %57 = vmatprep.subr.mxu0 0.0
    %58 = vmatpush1.msra.mxu0 %v28
    %59 = vmatprep.subr.mxu0 0.0
    %60 = vmatpush1.msra.mxu0 %v29
    %61 = vmatprep.subr.mxu0 0.0
    %62 = vmatpush1.msra.mxu0 %v30
    %63 = vmatprep.subr.mxu0 0.0
    %64 = vmatpush1.msra.mxu0 %v31
    %65 = vmatprep.subr.mxu0 0.0
    %66 = vmatpush1.msra.mxu0 %v32
    %67 = vmatprep.subr.mxu0 0.0
    %68 = vmatpush1.msra.mxu0 %v33
    %69 = vmatprep.subr.mxu0 0.0
    %70 = vmatpush1.msra.mxu0 %v34
    %71 = vmatprep.subr.mxu0 0.0
    %72 = vmatpush1.msra.mxu0 %v35
    %73 = vmatprep.subr.mxu0 0.0
    %74 = vmatpush1.msra.mxu0 %v36
    %75 = vmatprep.subr.mxu0 0.0
    %76 = vmatpush1.msra.mxu0 %v37
    %77 = vmatprep.subr.mxu0 0.0
    %78 = vmatpush1.msra.mxu0 0.0
    %79 = vmatprep.subr.mxu0 0.0
    %80 = vmatpush1.msra.mxu0 0.0
    %81 = vmatprep.subr.mxu0 0.0
    %82 = vmatpush1.msra.mxu0 0.0
    %83 = vmatprep.subr.mxu0 0.0
    %84 = vmatpush1.msra.mxu0 0.0
    %85 = vmatprep.subr.mxu0 0.0
    %86 = vmatpush1.msra.mxu0 0.0
    %87 = vmatprep.subr.mxu0 0.0
    %88 = vmatpush1.msra.mxu0 0.0
    %89 = vmatprep.subr.mxu0 0.0
    %90 = vmatpush1.msra.mxu0 0.0
    %91 = vmatprep.subr.mxu0 0.0
    %92 = vmatpush1.msra.mxu0 0.0
    %93 = vmatprep.subr.mxu0 0.0
    %94 = vmatpush1.msra.mxu0 0.0
    %95 = vmatprep.subr.mxu0 0.0
    %96 = vmatpush1.msra.mxu0 0.0
    %97 = vmatprep.subr.mxu0 0.0
    %98 = vmatpush1.msra.mxu0 0.0
    %99 = vmatprep.subr.mxu0 0.0
    %100 = vmatpush1.msra.mxu0 0.0
    %101 = vmatprep.subr.mxu0 0.0
    %102 = vmatpush1.msra.mxu0 0.0
    %103 = vmatprep.subr.mxu0 0.0
    %104 = vmatpush1.msra.mxu0 0.0
    %105 = vmatprep.subr.mxu0 0.0
    %106 = vmatpush1.msra.mxu0 0.0
    %107 = vmatprep.subr.mxu0 0.0
    %108 = vmatpush1.msra.mxu0 0.0
    %109 = vmatprep.mubr.f32.mxu0 0.0
    %110 = vmatmul.mubr.f32.gmra.mrb[0].mxu0 %v21
    %v111 = vpop.f32.mrb[0].mxu0
    %v112 = vadd.f32 %v43, %v111
    %v113 = vpop.f32.mrb[0].mxu0
    %114 = vdwg.mxu0
    %v115 = vxor.u32 %v112, 2147483648
    %v116 = vmul.f32 %v115, 1.442695
    %v117 = vpow.pop %v116
    %v118 = vadd.f32 %v117, 1.0
    %v119 = vrcp.pop %v118
    %v120 = vmul.f32 1.0, %v119
    %v121 = vmul.f32 %v112, %v120
    %v122 = vld [vmem:[%s3] sm:$0xff]
    %v123 = vld [vmem:[%s3 + $0x8] sm:$0xff]
    %v124 = vld [vmem:[%s3 + $0x10] sm:$0xff]
    %v125 = vld [vmem:[%s3 + $0x18] sm:$0xff]
    %v126 = vld [vmem:[%s4] sm:$0x1]
    %v128 = vlaneseq
    %v129 = vshrl.u32 %v128, 7
    %v130 = vsub.s32 0, %v129
    %v131 = vrot.slane %v126, %v130
    %vm133 = vcmask 261120
    %v135 = vsel %vm133, %v121, 0
    %137 = vmatprep.subr.mxu0 0.0
    %138 = vmatpush1.msra.mxu0 %v122
    %139 = vmatprep.subr.mxu0 0.0
    %140 = vmatpush1.msra.mxu0 %v123
    %141 = vmatprep.subr.mxu0 0.0
    %142 = vmatpush1.msra.mxu0 %v124
    %143 = vmatprep.subr.mxu0 0.0
    %144 = vmatpush1.msra.mxu0 %v125
    %145 = vmatprep.subr.mxu0 0.0
    %146 = vmatpush1.msra.mxu0 0.0
    %147 = vmatprep.subr.mxu0 0.0
    %148 = vmatpush1.msra.mxu0 0.0
    %149 = vmatprep.subr.mxu0 0.0
    %150 = vmatpush1.msra.mxu0 0.0
    %151 = vmatprep.subr.mxu0 0.0
    %152 = vmatpush1.msra.mxu0 0.0
    %153 = vmatprep.subr.mxu0 0.0
    %154 = vmatpush1.msra.mxu0 0.0
    %155 = vmatprep.subr.mxu0 0.0
    %156 = vmatpush1.msra.mxu0 0.0
    %157 = vmatprep.subr.mxu0 0.0
    %158 = vmatpush1.msra.mxu0 0.0
    %159 = vmatprep.subr.mxu0 0.0
    %160 = vmatpush1.msra.mxu0 0.0
    %161 = vmatprep.subr.mxu0 0.0
    %162 = vmatpush1.msra.mxu0 0.0
    %163 = vmatprep.subr.mxu0 0.0
    %164 = vmatpush1.msra.mxu0 0.0
    %165 = vmatprep.subr.mxu0 0.0
    %166 = vmatpush1.msra.mxu0 0.0
    %167 = vmatprep.subr.mxu0 0.0
    %168 = vmatpush1.msra.mxu0 0.0
    %169 = vmatprep.subr.mxu0 0.0
    %170 = vmatpush1.msra.mxu0 0.0
    %171 = vmatprep.subr.mxu0 0.0
    %172 = vmatpush1.msra.mxu0 0.0
    %173 = vmatprep.subr.mxu0 0.0
    %174 = vmatpush1.msra.mxu0 0.0
    %175 = vmatprep.subr.mxu0 0.0
    %176 = vmatpush1.msra.mxu0 0.0
    %177 = vmatprep.subr.mxu0 0.0
    %178 = vmatpush1.msra.mxu0 0.0
    %179 = vmatprep.subr.mxu0 0.0
    %180 = vmatpush1.msra.mxu0 0.0
    %181 = vmatprep.subr.mxu0 0.0
    %182 = vmatpush1.msra.mxu0 0.0
    %183 = vmatprep.subr.mxu0 0.0
    %184 = vmatpush1.msra.mxu0 0.0
    %185 = vmatprep.subr.mxu0 0.0
    %186 = vmatpush1.msra.mxu0 0.0
    %187 = vmatprep.subr.mxu0 0.0
    %188 = vmatpush1.msra.mxu0 0.0
    %189 = vmatprep.subr.mxu0 0.0
    %190 = vmatpush1.msra.mxu0 0.0
    %191 = vmatprep.subr.mxu0 0.0
    %192 = vmatpush1.msra.mxu0 0.0
    %193 = vmatprep.subr.mxu0 0.0
    %194 = vmatpush1.msra.mxu0 0.0
    %195 = vmatprep.subr.mxu0 0.0
    %196 = vmatpush1.msra.mxu0 0.0
    %197 = vmatprep.subr.mxu0 0.0
    %198 = vmatpush1.msra.mxu0 0.0
    %199 = vmatprep.subr.mxu0 0.0
    %200 = vmatpush1.msra.mxu0 0.0
    %201 = vmatprep.mubr.f32.mxu0 0.0
    %202 = vmatmul.mubr.f32.gmra.mrb[0].mxu0 %v135
    %v203 = vpop.f32.mrb[0].mxu0
    %v204 = vadd.f32 %v131, %v203
    %v205 = vpop.f32.mrb[0].mxu0
    %206 = vdwg.mxu0
    %207 = vst [vmem:[#allocation2] sm:$0xf] %v204
    // Predicated region
    $region22: #{tpu_custom_call.1} parent=1 // pred_check
      _
    $region23: #{tpu_custom_call.1} parent=1 // pred_check_branch
      %209 = sbr.rel (0) target = $region25
    $region24: #{tpu_custom_call.1} parent=1 // pred_region
      %s211 = ssub.s32 64, 64
      %212 = vsyncadd [#allocation3], %s211
      %s214 = sshll.u32 [#allocation2], 4
      %s215 = int_to_ptr.vmem [resolvable:$true] %s214
      %217 = dma.vmem_to_hbm [thread:$0]  %s215, 64, %s5, [#allocation3]
    $region25: #{tpu_custom_call.1} parent=1 // pred_fallthru
      _
    // Predicated region
    $region26: #{tpu_custom_call.1} parent=1 // pred_check
      _
    $region27: #{tpu_custom_call.1} parent=1 // pred_check_branch
      %219 = sbr.rel (0) target = $region29
    $region28: #{tpu_custom_call.1} parent=1 // pred_region
      %220 = dma.done [#allocation3], 64
    $region29: #{tpu_custom_call.1} parent=1 // pred_fallthru
      _
    %221 = vsyncpa [#allocation3], 1

// kernel: tpu_custom_call.1
$region0: #{tpu_custom_call.1}
  #allocation0 [shape = 'u32[]', space=smem, size = 0x4, offset = 0x4, fixed_abs, tag = 'smem constant byte address 0x4 - core index']
  #allocation1 [shape = 'u32[144,128]{1,0:T(1,128)}', space=vmem, size = 0x12000, scoped, tag = 'internal scratch']
  %s0 = inlined_call_operand.vmem [shape: f32[4,128], index: 0, kind: input, shape index: {}]
  %s1 = inlined_call_operand.vmem [shape: f32[128,32], index: 1, kind: input, shape index: {}]
  %s2 = inlined_call_operand.vmem [shape: f32[1,32], index: 2, kind: input, shape index: {}]
  %s3 = inlined_call_operand.vmem [shape: f32[32,128], index: 3, kind: input, shape index: {}]
  %s4 = inlined_call_operand.vmem [shape: f32[1,128], index: 4, kind: input, shape index: {}]
  %s5 = inlined_call_operand.hbm [shape: f32[4,128], index: 5, kind: output, shape index: {}]
  %s6 = sld [smem:[#allocation0]]
  $region30: #{tpu_custom_call.1} parent=0
    _
  %s8 = ssub.s32 1, %s6
  %s9 = scalar_select 0, %s8, %s6
  $region1: #{tpu_custom_call.1} parent=0
    #allocation2 [shape = 'u8[2048]{0}', space=vmem, size = 0x800, scoped, tag = 'output window, operand 0, single buffered']
    #allocation3 [shape = 's32[1]{0}', space=sflag, size = 0x4, scoped, tag = 'scoped memory for tpu_custom_call.1']
    %10 = vsyncpa [#allocation3], 0
    // Predicated region
    $region2: #{tpu_custom_call.1} parent=1 // pred_check
      _
    $region3: #{tpu_custom_call.1} parent=1 // pred_check_branch
      %12 = sbr.rel (0) target = $region5
    $region4: #{tpu_custom_call.1} parent=1 // pred_region
      _
    $region5: #{tpu_custom_call.1} parent=1 // pred_fallthru
      _
    // Predicated region
    $region6: #{tpu_custom_call.1} parent=1 // pred_check
      _
    $region7: #{tpu_custom_call.1} parent=1 // pred_check_branch
      %14 = sbr.rel (0) target = $region9
    $region8: #{tpu_custom_call.1} parent=1 // pred_region
      _
    $region9: #{tpu_custom_call.1} parent=1 // pred_fallthru
      _
    // Predicated region
    $region10: #{tpu_custom_call.1} parent=1 // pred_check
      _
    $region11: #{tpu_custom_call.1} parent=1 // pred_check_branch
      %16 = sbr.rel (0) target = $region13
    $region12: #{tpu_custom_call.1} parent=1 // pred_region
      _
    $region13: #{tpu_custom_call.1} parent=1 // pred_fallthru
      _
    // Predicated region
    $region14: #{tpu_custom_call.1} parent=1 // pred_check
      _
    $region15: #{tpu_custom_call.1} parent=1 // pred_check_branch
      %18 = sbr.rel (0) target = $region17
    $region16: #{tpu_custom_call.1} parent=1 // pred_region
      _
    $region17: #{tpu_custom_call.1} parent=1 // pred_fallthru
      _
    // Predicated region
    $region18: #{tpu_custom_call.1} parent=1 // pred_check
      _
    $region19: #{tpu_custom_call.1} parent=1 // pred_check_branch
      %20 = sbr.rel (0) target = $region21
    $region20: #{tpu_custom_call.1} parent=1 // pred_region
      _
    $region21: #{tpu_custom_call.1} parent=1 // pred_fallthru
      _
    %v21 = vld [vmem:[%s0] sm:$0xf]
    %v22 = vld [vmem:[%s1] sm:$0xff]
    %v23 = vld [vmem:[%s1 + $0x8] sm:$0xff]
    %v24 = vld [vmem:[%s1 + $0x10] sm:$0xff]
    %v25 = vld [vmem:[%s1 + $0x18] sm:$0xff]
    %v26 = vld [vmem:[%s1 + $0x20] sm:$0xff]
    %v27 = vld [vmem:[%s1 + $0x28] sm:$0xff]
    %v28 = vld [vmem:[%s1 + $0x30] sm:$0xff]
    %v29 = vld [vmem:[%s1 + $0x38] sm:$0xff]
    %v30 = vld [vmem:[%s1 + $0x40] sm:$0xff]
    %v31 = vld [vmem:[%s1 + $0x48] sm:$0xff]
    %v32 = vld [vmem:[%s1 + $0x50] sm:$0xff]
    %v33 = vld [vmem:[%s1 + $0x58] sm:$0xff]
    %v34 = vld [vmem:[%s1 + $0x60] sm:$0xff]
    %v35 = vld [vmem:[%s1 + $0x68] sm:$0xff]
    %v36 = vld [vmem:[%s1 + $0x70] sm:$0xff]
    %v37 = vld [vmem:[%s1 + $0x78] sm:$0xff]
    %v38 = vld [vmem:[%s2] sm:$0x1]
    %v40 = vlaneseq
    %v41 = vshrl.u32 %v40, 7
    %v42 = vsub.s32 0, %v41
    %v43 = vrot.slane %v38, %v42
    %45 = vmatprep.subr.mxu0 0.0
    %46 = vmatpush1.msra.mxu0 %v22
    %47 = vmatprep.subr.mxu0 0.0
    %48 = vmatpush1.msra.mxu0 %v23
    %49 = vmatprep.subr.mxu0 0.0
    %50 = vmatpush1.msra.mxu0 %v24
    %51 = vmatprep.subr.mxu0 0.0
    %52 = vmatpush1.msra.mxu0 %v25
    %53 = vmatprep.subr.mxu0 0.0
    %54 = vmatpush1.msra.mxu0 %v26
    %55 = vmatprep.subr.mxu0 0.0
    %56 = vmatpush1.msra.mxu0 %v27
    %57 = vmatprep.subr.mxu0 0.0
    %58 = vmatpush1.msra.mxu0 %v28
    %59 = vmatprep.subr.mxu0 0.0
    %60 = vmatpush1.msra.mxu0 %v29
    %61 = vmatprep.subr.mxu0 0.0
    %62 = vmatpush1.msra.mxu0 %v30
    %63 = vmatprep.subr.mxu0 0.0
    %64 = vmatpush1.msra.mxu0 %v31
    %65 = vmatprep.subr.mxu0 0.0
    %66 = vmatpush1.msra.mxu0 %v32
    %67 = vmatprep.subr.mxu0 0.0
    %68 = vmatpush1.msra.mxu0 %v33
    %69 = vmatprep.subr.mxu0 0.0
    %70 = vmatpush1.msra.mxu0 %v34
    %71 = vmatprep.subr.mxu0 0.0
    %72 = vmatpush1.msra.mxu0 %v35
    %73 = vmatprep.subr.mxu0 0.0
    %74 = vmatpush1.msra.mxu0 %v36
    %75 = vmatprep.subr.mxu0 0.0
    %76 = vmatpush1.msra.mxu0 %v37
    %77 = vmatprep.subr.mxu0 0.0
    %78 = vmatpush1.msra.mxu0 0.0
    %79 = vmatprep.subr.mxu0 0.0
    %80 = vmatpush1.msra.mxu0 0.0
    %81 = vmatprep.subr.mxu0 0.0
    %82 = vmatpush1.msra.mxu0 0.0
    %83 = vmatprep.subr.mxu0 0.0
    %84 = vmatpush1.msra.mxu0 0.0
    %85 = vmatprep.subr.mxu0 0.0
    %86 = vmatpush1.msra.mxu0 0.0
    %87 = vmatprep.subr.mxu0 0.0
    %88 = vmatpush1.msra.mxu0 0.0
    %89 = vmatprep.subr.mxu0 0.0
    %90 = vmatpush1.msra.mxu0 0.0
    %91 = vmatprep.subr.mxu0 0.0
    %92 = vmatpush1.msra.mxu0 0.0
    %93 = vmatprep.subr.mxu0 0.0
    %94 = vmatpush1.msra.mxu0 0.0
    %95 = vmatprep.subr.mxu0 0.0
    %96 = vmatpush1.msra.mxu0 0.0
    %97 = vmatprep.subr.mxu0 0.0
    %98 = vmatpush1.msra.mxu0 0.0
    %99 = vmatprep.subr.mxu0 0.0
    %100 = vmatpush1.msra.mxu0 0.0
    %101 = vmatprep.subr.mxu0 0.0
    %102 = vmatpush1.msra.mxu0 0.0
    %103 = vmatprep.subr.mxu0 0.0
    %104 = vmatpush1.msra.mxu0 0.0
    %105 = vmatprep.subr.mxu0 0.0
    %106 = vmatpush1.msra.mxu0 0.0
    %107 = vmatprep.subr.mxu0 0.0
    %108 = vmatpush1.msra.mxu0 0.0
    %109 = vmatprep.mubr.f32.mxu0 0.0
    %110 = vmatmul.mubr.f32.gmra.mrb[0].mxu0 %v21
    %v111 = vpop.f32.mrb[0].mxu0
    %v112 = vadd.f32 %v43, %v111
    %v113 = vpop.f32.mrb[0].mxu0
    %114 = vdwg.mxu0
    %v115 = vxor.u32 %v112, 2147483648
    %v116 = vmul.f32 %v115, 1.442695
    %v117 = vpow.pop %v116
    %v118 = vadd.f32 %v117, 1.0
    %v119 = vrcp.pop %v118
    %v120 = vmul.f32 1.0, %v119
    %v121 = vmul.f32 %v112, %v120
    %v122 = vld [vmem:[%s3] sm:$0xff]
    %v123 = vld [vmem:[%s3 + $0x8] sm:$0xff]
    %v124 = vld [vmem:[%s3 + $0x10] sm:$0xff]
    %v125 = vld [vmem:[%s3 + $0x18] sm:$0xff]
    %v126 = vld [vmem:[%s4] sm:$0x1]
    %v128 = vlaneseq
    %v129 = vshrl.u32 %v128, 7
    %v130 = vsub.s32 0, %v129
    %v131 = vrot.slane %v126, %v130
    %vm133 = vcmask 261120
    %v135 = vsel %vm133, %v121, 0
    %137 = vmatprep.subr.mxu0 0.0
    %138 = vmatpush1.msra.mxu0 %v122
    %139 = vmatprep.subr.mxu0 0.0
    %140 = vmatpush1.msra.mxu0 %v123
    %141 = vmatprep.subr.mxu0 0.0
    %142 = vmatpush1.msra.mxu0 %v124
    %143 = vmatprep.subr.mxu0 0.0
    %144 = vmatpush1.msra.mxu0 %v125
    %145 = vmatprep.subr.mxu0 0.0
    %146 = vmatpush1.msra.mxu0 0.0
    %147 = vmatprep.subr.mxu0 0.0
    %148 = vmatpush1.msra.mxu0 0.0
    %149 = vmatprep.subr.mxu0 0.0
    %150 = vmatpush1.msra.mxu0 0.0
    %151 = vmatprep.subr.mxu0 0.0
    %152 = vmatpush1.msra.mxu0 0.0
    %153 = vmatprep.subr.mxu0 0.0
    %154 = vmatpush1.msra.mxu0 0.0
    %155 = vmatprep.subr.mxu0 0.0
    %156 = vmatpush1.msra.mxu0 0.0
    %157 = vmatprep.subr.mxu0 0.0
    %158 = vmatpush1.msra.mxu0 0.0
    %159 = vmatprep.subr.mxu0 0.0
    %160 = vmatpush1.msra.mxu0 0.0
    %161 = vmatprep.subr.mxu0 0.0
    %162 = vmatpush1.msra.mxu0 0.0
    %163 = vmatprep.subr.mxu0 0.0
    %164 = vmatpush1.msra.mxu0 0.0
    %165 = vmatprep.subr.mxu0 0.0
    %166 = vmatpush1.msra.mxu0 0.0
    %167 = vmatprep.subr.mxu0 0.0
    %168 = vmatpush1.msra.mxu0 0.0
    %169 = vmatprep.subr.mxu0 0.0
    %170 = vmatpush1.msra.mxu0 0.0
    %171 = vmatprep.subr.mxu0 0.0
    %172 = vmatpush1.msra.mxu0 0.0
    %173 = vmatprep.subr.mxu0 0.0
    %174 = vmatpush1.msra.mxu0 0.0
    %175 = vmatprep.subr.mxu0 0.0
    %176 = vmatpush1.msra.mxu0 0.0
    %177 = vmatprep.subr.mxu0 0.0
    %178 = vmatpush1.msra.mxu0 0.0
    %179 = vmatprep.subr.mxu0 0.0
    %180 = vmatpush1.msra.mxu0 0.0
    %181 = vmatprep.subr.mxu0 0.0
    %182 = vmatpush1.msra.mxu0 0.0
    %183 = vmatprep.subr.mxu0 0.0
    %184 = vmatpush1.msra.mxu0 0.0
    %185 = vmatprep.subr.mxu0 0.0
    %186 = vmatpush1.msra.mxu0 0.0
    %187 = vmatprep.subr.mxu0 0.0
    %188 = vmatpush1.msra.mxu0 0.0
    %189 = vmatprep.subr.mxu0 0.0
    %190 = vmatpush1.msra.mxu0 0.0
    %191 = vmatprep.subr.mxu0 0.0
    %192 = vmatpush1.msra.mxu0 0.0
    %193 = vmatprep.subr.mxu0 0.0
    %194 = vmatpush1.msra.mxu0 0.0
    %195 = vmatprep.subr.mxu0 0.0
    %196 = vmatpush1.msra.mxu0 0.0
    %197 = vmatprep.subr.mxu0 0.0
    %198 = vmatpush1.msra.mxu0 0.0
    %199 = vmatprep.subr.mxu0 0.0
    %200 = vmatpush1.msra.mxu0 0.0
    %201 = vmatprep.mubr.f32.mxu0 0.0
    %202 = vmatmul.mubr.f32.gmra.mrb[0].mxu0 %v135
    %v203 = vpop.f32.mrb[0].mxu0
    %v204 = vadd.f32 %v131, %v203
    %v205 = vpop.f32.mrb[0].mxu0
    %206 = vdwg.mxu0
    %207 = vst [vmem:[#allocation2] sm:$0xf] %v204
    // Predicated region
    $region22: #{tpu_custom_call.1} parent=1 // pred_check
      _
    $region23: #{tpu_custom_call.1} parent=1 // pred_check_branch
      %209 = sbr.rel (0) target = $region25
    $region24: #{tpu_custom_call.1} parent=1 // pred_region
      %s211 = ssub.s32 64, 64
      %212 = vsyncadd [#allocation3], %s211
      %s214 = sshll.u32 [#allocation2], 4
      %s215 = int_to_ptr.vmem [resolvable:$true] %s214
      %217 = dma.vmem_to_hbm [thread:$0]  %s215, 64, %s5, [#allocation3]
    $region25: #{tpu_custom_call.1} parent=1 // pred_fallthru
      _
    // Predicated region
    $region26: #{tpu_custom_call.1} parent=1 // pred_check
      _
    $region27: #{tpu_custom_call.1} parent=1 // pred_check_branch
      %219 = sbr.rel (0) target = $region29
    $region28: #{tpu_custom_call.1} parent=1 // pred_region
      %220 = dma.done [#allocation3], 64
    $region29: #{tpu_custom_call.1} parent=1 // pred_fallthru
      _
    %221 = vsyncpa [#allocation3], 1

</llo_original>
